<compile_context>
chip_gen: v5e
topology: v5e:2x2
jax: 0.10.0
libtpu: 0.0.40
codegen_flags: <defaults>
</compile_context>

<pallas_src>
import math
from functools import partial

import jax
import jax.numpy as jnp
from jax import lax
from jax.experimental import pallas as pl
from jax.experimental.pallas import tpu as pltpu

_VMEM_LIMIT = 48 * 1024 * 1024     # v7x-safe scoped-VMEM cap (64 MiB physical)
_VMEM_BUDGET = 40 * 1024 * 1024    # working-set budget used when picking tiles


# ---------------------------------------------------------------------------
# tiling helpers
# ---------------------------------------------------------------------------

def _pick_tile(dim, candidates):
    """Largest candidate tile that evenly divides `dim`, else the full dim."""
    for c in candidates:
        if dim % c == 0:
            return c
    return dim


def _pick_heads_per_block(h, d_k, tq, tkv):
    """Heads per attention block.

    Prefer the full d_model (fetch the mask once per (b,qb,kb), keep Q
    resident); otherwise the largest lane-dense group ((g*d_k) % 128 == 0)
    whose double-buffered working set fits the VMEM budget."""
    d_model = h * d_k

    def working_set(hd):
        qkv = (tq + 2 * tkv) * hd * 2          # bf16 q / k / v blocks
        out = tq * hd * 2                      # bf16 ctx block
        msk = tq * tkv * 1                     # int8 mask block
        acc = tq * hd * 4                      # f32 accumulator scratch
        return 2 * (qkv + out + msk) + acc     # double-buffered pipeline

    if working_set(d_model) <= _VMEM_BUDGET:
        return h                               # full-D block — always layout-legal
    legal = [g for g in range(1, h) if h % g == 0 and (g * d_k) % 128 == 0]
    fitting = [g for g in legal if working_set(g * d_k) <= _VMEM_BUDGET]
    if fitting:
        return max(fitting)
    return min(legal) if legal else h


# ---------------------------------------------------------------------------
# tiled linear:  out = x @ w + b        (bf16 operands, f32 accumulation)
# ---------------------------------------------------------------------------

def _linear_kernel(x_ref, w_ref, b_ref, o_ref, acc_ref):
    @pl.when(pl.program_id(2) == 0)
    def _():
        acc_ref[...] = jnp.zeros_like(acc_ref)

    acc_ref[...] += jnp.dot(x_ref[...].astype(jnp.bfloat16), w_ref[...],
                            preferred_element_type=jnp.float32)

    @pl.when(pl.program_id(2) == pl.num_programs(2) - 1)
    def _():
        o_ref[...] = (acc_ref[...] + b_ref[...]).astype(o_ref.dtype)


def _linear(x2d, w, b, out_dtype):
    """x2d: (M, K) f32/bf16, w: (K, N) bf16, b: (1, N) f32 -> (M, N) out_dtype."""
    M, K = x2d.shape
    N = w.shape[1]
    tm = _pick_tile(M, (512, 256, 128))
    tn = _pick_tile(N, (512, 256, 128))
    tk = _pick_tile(K, (1024, 512, 256, 128))

    return pl.pallas_call(
        _linear_kernel,
        out_shape=jax.ShapeDtypeStruct((M, N), out_dtype),
        grid=(M // tm, N // tn, K // tk),
        in_specs=[
            pl.BlockSpec((tm, tk), lambda i, j, k: (i, k)),
            pl.BlockSpec((tk, tn), lambda i, j, k: (k, j)),
            pl.BlockSpec((1, tn), lambda i, j, k: (0, j)),
        ],
        out_specs=pl.BlockSpec((tm, tn), lambda i, j, k: (i, j)),
        scratch_shapes=[pltpu.VMEM((tm, tn), jnp.float32)],
        compiler_params=pltpu.CompilerParams(
            dimension_semantics=("parallel", "parallel", "arbitrary"),
            vmem_limit_bytes=_VMEM_LIMIT),
    )(x2d, w, b)


# ---------------------------------------------------------------------------
# attention kernels (no softmax — faithful to the reference)
# ---------------------------------------------------------------------------

def _attn_mask_kernel(q_ref, k_ref, v_ref, m_ref, o_ref, acc_ref, *, d_k, hpb):
    """Masked path: scores = Q_g K_gᵀ (scale pre-folded into Q), masked_fill,
    then scores @ V_g accumulated over the kv axis directly into acc slices."""
    kb = pl.program_id(3)

    @pl.when(kb == 0)
    def _():
        acc_ref[...] = jnp.zeros_like(acc_ref)

    q = q_ref[0]
    k = k_ref[0]
    v = v_ref[0]
    mvals = m_ref[0].astype(jnp.float32)       # single int8 keep mask block

    for g in range(hpb):                       # static unroll over heads
        sl = slice(g * d_k, (g + 1) * d_k)
        # contract on the last dims — MXU consumes K untransposed
        s = lax.dot_general(q[:, sl], k[:, sl], (((1,), (1,)), ((), ())),
                            preferred_element_type=jnp.float32)
        s = jnp.where(mvals == 0.0, jnp.float32(-1e9), s)   # masked_fill
        acc_ref[:, sl] += jnp.dot(s.astype(v.dtype), v[:, sl],
                                  preferred_element_type=jnp.float32)

    @pl.when(kb == pl.num_programs(3) - 1)
    def _():
        o_ref[0] = acc_ref[...].astype(o_ref.dtype)


def _ktv_kernel(k_ref, v_ref, o_ref, acc_ref, *, d_k, hpb):
    """Unmasked path stage 1: per-head KᵀV (d_k, d_k), reduced over the kv axis."""
    kb = pl.program_id(2)

    @pl.when(kb == 0)
    def _():
        acc_ref[...] = jnp.zeros_like(acc_ref)

    k = k_ref[0]
    v = v_ref[0]
    for g in range(hpb):
        sl = slice(g * d_k, (g + 1) * d_k)
        acc_ref[:, sl] += lax.dot_general(
            k[:, sl], v[:, sl], (((0,), (0,)), ((), ())),
            preferred_element_type=jnp.float32)

    @pl.when(kb == pl.num_programs(2) - 1)
    def _():
        o_ref[0] = acc_ref[...].astype(o_ref.dtype)


def _ctx_kernel(q_ref, ktv_ref, o_ref, *, d_k, hpb):
    """Unmasked path stage 2: ctx_g = Q_g @ (KᵀV)_g  (scale already in Q)."""
    q = q_ref[0]
    ktv = ktv_ref[0].astype(q.dtype)
    for g in range(hpb):
        sl = slice(g * d_k, (g + 1) * d_k)
        o_ref[0, :, sl] = jnp.dot(q[:, sl], ktv[:, sl],
                                  preferred_element_type=jnp.float32
                                  ).astype(o_ref.dtype)


def _prepare_mask(mask, B, S):
    """Torch-style mask (broadcastable to (B,1,S,S)) -> int8 keep mask (mB,S,S)."""
    m = jnp.asarray(mask)
    if m.ndim == 4:
        if m.shape[1] != 1:
            # TODO(synk): per-head masks are not supported by this layout.
            raise NotImplementedError("per-head masks not supported")
        m = m[:, 0]
    elif m.ndim == 2:
        m = m[None]
    assert m.ndim == 3, "mask must be (S,S), (mB,S,S) or (mB,1,S,S)"
    mB = m.shape[0]
    assert mB in (1, B), "mask batch dim must be 1 or B"
    m = jnp.broadcast_to(m, (mB, S, S))
    return (m != 0).astype(jnp.int8), mB


def _attention(qh, kh, vh, mask, h, d_k):
    """qh/kh/vh: (B, S, D) bf16 projections (heads packed along D, h-major).
    Returns (B, S, D) bf16 with heads packed the same way (no transposes)."""
    B, S, D = qh.shape
    tq = _pick_tile(S, (512, 256, 128))
    tkv = _pick_tile(S, (512, 256, 128))
    hpb = _pick_heads_per_block(h, d_k, tq, tkv)
    hd = hpb * d_k
    n_hb = h // hpb

    if mask is None:
        # No softmax in the reference -> attention is linear in the scores:
        # (Q Kᵀ) V == Q (Kᵀ V).  Stage 1: small per-head KᵀV reduction.
        ktv = pl.pallas_call(
            partial(_ktv_kernel, d_k=d_k, hpb=hpb),
            out_shape=jax.ShapeDtypeStruct((B, d_k, D), jnp.float32),
            grid=(B, n_hb, S // tkv),
            in_specs=[pl.BlockSpec((1, tkv, hd), lambda b, hb, kb: (b, kb, hb)),
                      pl.BlockSpec((1, tkv, hd), lambda b, hb, kb: (b, kb, hb))],
            out_specs=pl.BlockSpec((1, d_k, hd), lambda b, hb, kb: (b, 0, hb)),
            scratch_shapes=[pltpu.VMEM((d_k, hd), jnp.float32)],
            compiler_params=pltpu.CompilerParams(
                dimension_semantics=("parallel", "parallel", "arbitrary"),
                vmem_limit_bytes=_VMEM_LIMIT),
        )(kh, vh)

        # Stage 2: ctx = Q @ KᵀV, fully parallel grid.
        return pl.pallas_call(
            partial(_ctx_kernel, d_k=d_k, hpb=hpb),
            out_shape=jax.ShapeDtypeStruct((B, S, D), jnp.bfloat16),
            grid=(B, S // tq, n_hb),
            in_specs=[pl.BlockSpec((1, tq, hd), lambda b, qb, hb: (b, qb, hb)),
                      pl.BlockSpec((1, d_k, hd), lambda b, qb, hb: (b, 0, hb))],
            out_specs=pl.BlockSpec((1, tq, hd), lambda b, qb, hb: (b, qb, hb)),
            compiler_params=pltpu.CompilerParams(
                dimension_semantics=("parallel", "parallel", "parallel"),
                vmem_limit_bytes=_VMEM_LIMIT),
        )(qh, ktv)

    keep, mB = _prepare_mask(mask, B, S)
    if mB == 1:
        m_idx = lambda b, qb, hb, kb: (0, qb, kb)
    else:
        m_idx = lambda b, qb, hb, kb: (b, qb, kb)

    return pl.pallas_call(
        partial(_attn_mask_kernel, d_k=d_k, hpb=hpb),
        out_shape=jax.ShapeDtypeStruct((B, S, D), jnp.bfloat16),
        grid=(B, S // tq, n_hb, S // tkv),
        in_specs=[pl.BlockSpec((1, tq, hd), lambda b, qb, hb, kb: (b, qb, hb)),
                  pl.BlockSpec((1, tkv, hd), lambda b, qb, hb, kb: (b, kb, hb)),
                  pl.BlockSpec((1, tkv, hd), lambda b, qb, hb, kb: (b, kb, hb)),
                  pl.BlockSpec((1, tq, tkv), m_idx)],
        out_specs=pl.BlockSpec((1, tq, hd), lambda b, qb, hb, kb: (b, qb, hb)),
        scratch_shapes=[pltpu.VMEM((tq, hd), jnp.float32)],
        compiler_params=pltpu.CompilerParams(
            dimension_semantics=("parallel", "parallel", "parallel", "arbitrary"),
            vmem_limit_bytes=_VMEM_LIMIT),
    )(qh, kh, vh, keep)


# ---------------------------------------------------------------------------
# Module wrapper
# ---------------------------------------------------------------------------

class MultiHeadAttentionBlockPallas:
    def __init__(self, d_model: int, num_head: int, key):
        assert d_model % num_head == 0
        self.d_model = d_model
        self.h = num_head
        self.d_k = d_model // num_head

        ks = jax.random.split(key, 8)
        bound = 1.0 / math.sqrt(d_model)
        scale = 1.0 / math.sqrt(self.d_k)

        def lin(kw, kb, fold=1.0):
            # stored as (d_in, d_out) so kernels do x @ w (== x @ W^T in torch);
            # weights in bf16 (MXU-native), biases in f32 (added in f32 acc).
            w = jax.random.uniform(kw, (d_model, d_model), jnp.float32, -bound, bound)
            b = jax.random.uniform(kb, (1, d_model), jnp.float32, -bound, bound)
            return (w * fold).astype(jnp.bfloat16), b * fold

        # 1/sqrt(d_k) folded into the Q projection (one-time init cost).
        self.wq, self.bq = lin(ks[0], ks[1], fold=scale)
        self.wk, self.bk = lin(ks[2], ks[3])
        self.wv, self.bv = lin(ks[4], ks[5])
        self.wo, self.bo = lin(ks[6], ks[7])

    def __call__(self, q, k, v, mask=None):
        B, S, D = q.shape

        # projections: tiled, pipelined bf16 matmul kernels on (B*S, D)
        query = _linear(q.reshape(B * S, D), self.wq, self.bq,
                        jnp.bfloat16).reshape(B, S, D)
        key_ = _linear(k.reshape(B * S, D), self.wk, self.bk,
                       jnp.bfloat16).reshape(B, S, D)
        value = _linear(v.reshape(B * S, D), self.wv, self.bv,
                        jnp.bfloat16).reshape(B, S, D)

        # attention reads/writes heads directly from the (B, S, D) layout —
        # the head split/merge of the PyTorch code is folded into BlockSpecs.
        ctx = _attention(query, key_, value, mask, self.h, self.d_k)

        out = _linear(ctx.reshape(B * S, D), self.wo, self.bo, jnp.float32)
        return out.reshape(B, S, self.d_model)


# ---------------------------------------------------------------------------
# Pure-JAX reference (mirrors the PyTorch forward, incl. the discarded softmax;
# 1/sqrt(d_k) is pre-folded into wq/bq, which is math-equivalent to the
# reference's explicit divide)
# ---------------------------------------------------------------------------

def _reference(block, q, k, v, mask=None):
    B, S, D = q.shape
    h, d_k = block.h, block.d_k
    wq, wk, wv, wo = (w.astype(jnp.float32)
                      for w in (block.wq, block.wk, block.wv, block.wo))
    query = q.reshape(B * S, D) @ wq + block.bq
    key_ = k.reshape(B * S, D) @ wk + block.bk
    value = v.reshape(B * S, D) @ wv + block.bv

    def split(x):
        return x.reshape(B, S, h, d_k).transpose(0, 2, 1, 3)

    qh, kh, vh = split(query), split(key_), split(value)
    scores = jnp.einsum("bhqd,bhkd->bhqk", qh, kh)   # scale already in wq/bq
    if mask is not None:
        scores = jnp.where(jnp.asarray(mask) == 0, jnp.float32(-1e9), scores)
    # softmax result is discarded in the reference -> no softmax here
    x = jnp.einsum("bhqk,bhkd->bhqd", scores, vh)
    x = x.transpose(0, 2, 1, 3).reshape(B * S, h * d_k)
    return (x @ wo + block.bo).reshape(B, S, D)


def _check(name, out, ref, tol=4e-2):
    """Scaled max-norm check: bf16 operands give few-percent worst-case error
    relative to the largest magnitudes flowing through the matmuls (which,
    with the faithful no-softmax + masked_fill(-1e9) semantics, are ~1e9)."""
    out = out.astype(jnp.float32)
    err = float(jnp.max(jnp.abs(out - ref)))
    scale = float(jnp.max(jnp.abs(ref))) + 1.0
    assert err <= tol * scale, f"{name}: scaled max err {err / scale:.3e} > {tol}"


# ---------------------------------------------------------------------------

if __name__ == "__main__":
    B, S, d_model, num_head = 2, 8, 32, 4

    root = jax.random.PRNGKey(0)
    k_params, k_q, k_k, k_v = jax.random.split(root, 4)

    block = MultiHeadAttentionBlockPallas(d_model, num_head, k_params)

    q = jax.random.normal(k_q, (B, S, d_model), jnp.float32)
    k = jax.random.normal(k_k, (B, S, d_model), jnp.float32)
    v = jax.random.normal(k_v, (B, S, d_model), jnp.float32)

    # 1) cross-attention, no mask (linear-attention shortcut path)
    out = jax.block_until_ready(block(q, k, v, mask=None))
    assert out.shape == (B, S, d_model) and out.dtype == jnp.float32
    _check("no-mask", out, _reference(block, q, k, v, mask=None))

    # 2) self-attention with a causal mask (torch-style (1, 1, S, S) of 0/1)
    causal = jnp.tril(jnp.ones((S, S), jnp.int32))[None, None]
    out_m = jax.block_until_ready(block(q, q, q, mask=causal))
    assert out_m.shape == (B, S, d_model)
    _check("mask", out_m, _reference(block, q, q, q, mask=causal))

    print("KERNEL_OK")
</pallas_src>

<mosaic_0001>
module attributes {stable_mosaic.version = 11 : i64} {
  func.func @_linear_kernel(%arg0: i32, %arg1: i32, %arg2: i32, %arg3: memref<16x32xf32, #tpu.memory_space<vmem>>, %arg4: memref<32x32xbf16, #tpu.memory_space<vmem>>, %arg5: memref<1x32xf32, #tpu.memory_space<vmem>>, %arg6: memref<16x32xbf16, #tpu.memory_space<vmem>>, %arg7: memref<16x32xf32, #tpu.memory_space<vmem>>) attributes {dimension_semantics = [#tpu.dimension_semantics<parallel>, #tpu.dimension_semantics<parallel>, #tpu.dimension_semantics<arbitrary>], iteration_bounds = array<i64: 1, 1, 1>, scalar_prefetch = 0 : i64, scratch_operands = 1 : i64, tpu.core_type = #tpu.core_type<tc>, window_params = [{transform_indices = @transform_0, window_bounds = array<i64: 16, 32>}, {transform_indices = @transform_1, window_bounds = array<i64: 32, 32>}, {transform_indices = @transform_2, window_bounds = array<i64: 1, 32>}, {transform_indices = @transform_3, window_bounds = array<i64: 16, 32>}]} {
    %c0_i32 = arith.constant 0 : i32
    %0 = arith.cmpi eq, %arg2, %c0_i32 : i32
    %1 = arith.extui %0 : i1 to i32
    %c0_i32_0 = arith.constant 0 : i32
    %2 = arith.cmpi ne, %1, %c0_i32_0 : i32
    scf.if %2 {
      %cst_10 = arith.constant 0.000000e+00 : f32
      %13 = vector.broadcast %cst_10 : f32 to vector<16x32xf32>
      %c0_11 = arith.constant 0 : index
      %c0_12 = arith.constant 0 : index
      %14 = vector.load %arg7[%c0_11, %c0_12] : memref<16x32xf32, #tpu.memory_space<vmem>>, vector<16x32xf32>
      tpu.vector_store %arg7[%c0_11, %c0_12], %13 {strides = array<i32>} : memref<16x32xf32, #tpu.memory_space<vmem>>, vector<16x32xf32>,
    } else {
    }
    %c0 = arith.constant 0 : index
    %c0_1 = arith.constant 0 : index
    %3 = vector.load %arg7[%c0, %c0_1] : memref<16x32xf32, #tpu.memory_space<vmem>>, vector<16x32xf32>
    %c0_2 = arith.constant 0 : index
    %c0_3 = arith.constant 0 : index
    %4 = vector.load %arg3[%c0_2, %c0_3] : memref<16x32xf32, #tpu.memory_space<vmem>>, vector<16x32xf32>
    %5 = arith.truncf %4 : vector<16x32xf32> to vector<16x32xbf16>
    %c0_4 = arith.constant 0 : index
    %c0_5 = arith.constant 0 : index
    %6 = vector.load %arg4[%c0_4, %c0_5] : memref<32x32xbf16, #tpu.memory_space<vmem>>, vector<32x32xbf16>
    %cst = arith.constant dense<0.000000e+00> : vector<16x32xf32>
    %7 = tpu.matmul %5, %6, %cst {dimension_numbers = #tpu.dot_dimension_numbers<[1], [0], [0], [1], [0, 0, 1, 1], [], []>} : vector<16x32xbf16>, vector<32x32xbf16>, vector<16x32xf32> -> vector<16x32xf32>
    %8 = arith.addf %3, %7 : vector<16x32xf32>
    %c0_6 = arith.constant 0 : index
    %c0_7 = arith.constant 0 : index
    %9 = vector.load %arg7[%c0_6, %c0_7] : memref<16x32xf32, #tpu.memory_space<vmem>>, vector<16x32xf32>
    tpu.vector_store %arg7[%c0_6, %c0_7], %8 {strides = array<i32>} : memref<16x32xf32, #tpu.memory_space<vmem>>, vector<16x32xf32>,
    %c0_i32_8 = arith.constant 0 : i32
    %10 = arith.cmpi eq, %arg2, %c0_i32_8 : i32
    %11 = arith.extui %10 : i1 to i32
    %c0_i32_9 = arith.constant 0 : i32
    %12 = arith.cmpi ne, %11, %c0_i32_9 : i32
    scf.if %12 {
      %c0_10 = arith.constant 0 : index
      %c0_11 = arith.constant 0 : index
      %13 = vector.load %arg7[%c0_10, %c0_11] : memref<16x32xf32, #tpu.memory_space<vmem>>, vector<16x32xf32>
      %c0_12 = arith.constant 0 : index
      %c0_13 = arith.constant 0 : index
      %14 = vector.load %arg5[%c0_12, %c0_13] : memref<1x32xf32, #tpu.memory_space<vmem>>, vector<1x32xf32>
      %15 = vector.broadcast %14 : vector<1x32xf32> to vector<16x32xf32>
      %16 = arith.addf %13, %15 : vector<16x32xf32>
      %17 = arith.truncf %16 : vector<16x32xf32> to vector<16x32xbf16>
      %c0_14 = arith.constant 0 : index
      %c0_15 = arith.constant 0 : index
      %18 = vector.load %arg6[%c0_14, %c0_15] : memref<16x32xbf16, #tpu.memory_space<vmem>>, vector<16x32xbf16>
      tpu.vector_store %arg6[%c0_14, %c0_15], %17 {strides = array<i32>} : memref<16x32xbf16, #tpu.memory_space<vmem>>, vector<16x32xbf16>,
    } else {
    }
    return
  }
  func.func @transform_0(%arg0: i32, %arg1: i32, %arg2: i32) -> (i32, i32) {
    %c0_i32 = arith.constant 0 : i32
    return %arg0, %arg2 : i32, i32
  }
  func.func @transform_1(%arg0: i32, %arg1: i32, %arg2: i32) -> (i32, i32) {
    %c0_i32 = arith.constant 0 : i32
    return %arg2, %arg1 : i32, i32
  }
  func.func @transform_2(%arg0: i32, %arg1: i32, %arg2: i32) -> (i32, i32) {
    %c0_i32 = arith.constant 0 : i32
    %c0_i32_0 = arith.constant 0 : i32
    return %c0_i32, %arg1 : i32, i32
  }
  func.func @transform_3(%arg0: i32, %arg1: i32, %arg2: i32) -> (i32, i32) {
    %c0_i32 = arith.constant 0 : i32
    return %arg0, %arg1 : i32, i32
  }
}

</mosaic_0001>

<llo_original>
// kernel: tpu_custom_call.1
$region0: #{tpu_custom_call.1}
  #allocation0 [shape = 'u32[]', space=smem, size = 0x4, offset = 0x4, fixed_abs, tag = 'smem constant byte address 0x4 - core index']
  #allocation1 [shape = 'u32[72,128]{1,0:T(1,128)}', space=vmem, size = 0x9000, scoped, tag = 'internal scratch']
  #allocation2 [shape = 'f32[16,32]{1,0:T(8,128)}', space=vmem, size = 0x2000, scoped, tag = 'scratch operand']
  %s0 = inlined_call_operand.hbm [shape: f32[16,32], index: 0, kind: input, shape index: {}]
  %s1 = inlined_call_operand.hbm [shape: bf16[32,32], index: 1, kind: input, shape index: {}]
  %s2 = inlined_call_operand.vmem [shape: f32[1,32], index: 2, kind: input, shape index: {}]
  %s3 = inlined_call_operand.hbm [shape: bf16[16,32], index: 3, kind: output, shape index: {}]
  %s4 = sld [smem:[#allocation0]]
  $region38: #{tpu_custom_call.1} parent=0
    _
  %s6 = ssub.s32 1, %s4
  %s7 = scalar_select 0, %s6, %s4
  $region1: #{tpu_custom_call.1} parent=0
    #allocation3 [shape = 'u8[8192]{0}', space=vmem, size = 0x2000, scoped, tag = 'input window, operand 0, single buffered']
    #allocation4 [shape = 's32[1]{0}', space=sflag, size = 0x4, scoped, tag = 'scoped memory for tpu_custom_call.1']
    #allocation5 [shape = 's32[1]{0}', space=sflag, size = 0x4, scoped, tag = 'scoped memory for tpu_custom_call.1']
    #allocation6 [shape = 'u8[8192]{0}', space=vmem, size = 0x2000, scoped, tag = 'input window, operand 1, single buffered']
    #allocation7 [shape = 's32[1]{0}', space=sflag, size = 0x4, scoped, tag = 'scoped memory for tpu_custom_call.1']
    #allocation8 [shape = 'u8[4096]{0}', space=vmem, size = 0x1000, scoped, tag = 'output window, operand 0, single buffered']
    %8 = vsyncpa [#allocation4], 0
    %9 = vsyncpa [#allocation7], 0
    %10 = vsyncpa [#allocation5], 0
    // Predicated region
    $region2: #{tpu_custom_call.1} parent=1 // pred_check
      _
    $region3: #{tpu_custom_call.1} parent=1 // pred_check_branch
      %12 = sbr.rel (0) target = $region5
    $region4: #{tpu_custom_call.1} parent=1 // pred_region
      %14 = vsyncadd [#allocation4], 0
      %s15 = sshll.u32 %s0, 4
      %s16 = int_to_ptr.hbm [resolvable:$true] %s15
      %s17 = sshll.u32 [#allocation3], 4
      %s18 = int_to_ptr.vmem [resolvable:$true] %s17
      %23 = dma.hbm_to_vmem [thread:$0]  %s16, 256, %s18, [#allocation4], 128, 128, 8
    $region5: #{tpu_custom_call.1} parent=1 // pred_fallthru
      _
    // Predicated region
    $region6: #{tpu_custom_call.1} parent=1 // pred_check
      _
    $region7: #{tpu_custom_call.1} parent=1 // pred_check_branch
      %25 = sbr.rel (0) target = $region9
    $region8: #{tpu_custom_call.1} parent=1 // pred_region
      %27 = vsyncadd [#allocation7], 0
      %s28 = sshll.u32 %s1, 4
      %s29 = int_to_ptr.hbm [resolvable:$true] %s28
      %s30 = sshll.u32 [#allocation6], 4
      %s31 = int_to_ptr.vmem [resolvable:$true] %s30
      %36 = dma.hbm_to_vmem [thread:$0]  %s29, 256, %s31, [#allocation7], 64, 64, 4
    $region9: #{tpu_custom_call.1} parent=1 // pred_fallthru
      _
    // Predicated region
    $region10: #{tpu_custom_call.1} parent=1 // pred_check
      _
    $region11: #{tpu_custom_call.1} parent=1 // pred_check_branch
      %38 = sbr.rel (0) target = $region13
    $region12: #{tpu_custom_call.1} parent=1 // pred_region
      _
    $region13: #{tpu_custom_call.1} parent=1 // pred_fallthru
      _
    // Predicated region
    $region14: #{tpu_custom_call.1} parent=1 // pred_check
      _
    $region15: #{tpu_custom_call.1} parent=1 // pred_check_branch
      %40 = sbr.rel (0) target = $region17
    $region16: #{tpu_custom_call.1} parent=1 // pred_region
      %42 = dma.done [#allocation4], 256
    $region17: #{tpu_custom_call.1} parent=1 // pred_fallthru
      _
    // Predicated region
    $region18: #{tpu_custom_call.1} parent=1 // pred_check
      _
    $region19: #{tpu_custom_call.1} parent=1 // pred_check_branch
      %44 = sbr.rel (0) target = $region21
    $region20: #{tpu_custom_call.1} parent=1 // pred_region
      %46 = dma.done [#allocation7], 256
    $region21: #{tpu_custom_call.1} parent=1 // pred_fallthru
      _
    %p48 = scmp.eq.s32.totalorder 0, 0
    // Predicated region
    $region22: #{tpu_custom_call.1} parent=1 // pred_check
      %p49 = pneg %p48
    $region23: #{tpu_custom_call.1} parent=1 // pred_check_branch
      %51 = sbr.rel (%p49) target = $region25
    $region24: #{tpu_custom_call.1} parent=1 // pred_region
      %vm52 = vcmask 261120
      %53 = vst.msk [vmem:[#allocation2] sm:$0xff] %vm52, 0.0
      %54 = vst.msk [vmem:[#allocation2 + $0x8] sm:$0xff] %vm52, 0.0
    $region25: #{tpu_custom_call.1} parent=1 // pred_fallthru
      _
    %v55 = vld [vmem:[#allocation2] sm:$0xff]
    %v56 = vld [vmem:[#allocation2 + $0x8] sm:$0xff]
    %v57 = vld [vmem:[#allocation3] sm:$0xff]
    %v58 = vld [vmem:[#allocation3 + $0x8] sm:$0xff]
    %v59 = vpack.c.bf16 %v58, %v57
    %v60 = vld [vmem:[#allocation6] sm:$0xf]
    %v61 = vld [vmem:[#allocation6 + $0x4] sm:$0xf]
    %v62 = vld [vmem:[#allocation6 + $0x8] sm:$0xf]
    %v63 = vld [vmem:[#allocation6 + $0xc] sm:$0xf]
    %v68 = vunpack.c.l.b16 %v60
    %v69 = vunpack.c.l.b16 %v61
    %v70 = vunpack.c.l.b16 %v62
    %v71 = vunpack.c.l.b16 %v63
    %v72 = vpack.c.b16 %v69, %v68
    %v73 = vpack.c.b16 %v71, %v70
    %vm76 = vcmask 261120
    %v78 = vsel %vm76, %v59, 0
    %80 = vmatpush.bf16.msra.mxu0 0
    %81 = vmatpush.bf16.msra.mxu0 0
    %82 = vmatpush.bf16.msra.mxu0 0
    %83 = vmatpush.bf16.msra.mxu0 0
    %84 = vmatpush.bf16.msra.mxu0 0
    %85 = vmatpush.bf16.msra.mxu0 0
    %86 = vmatpush.bf16.msra.mxu0 %v73
    %87 = vmatpush.bf16.msra.mxu0 %v72
    %88 = vmatmul.bf16.gmra.mxu0 %v78
    %v89 = vpop.f32.mrf.mxu0
    %v90 = vadd.f32 0.0, %v89
    %v91 = vpop.f32.mrf.mxu0
    %v92 = vadd.f32 0.0, %v91
    %93 = vdwg.mxu0
    %v94 = vadd.f32 %v55, %v90
    %v95 = vadd.f32 %v56, %v92
    %96 = vst.msk [vmem:[#allocation2] sm:$0xff] %vm76, %v94
    %97 = vst.msk [vmem:[#allocation2 + $0x8] sm:$0xff] %vm76, %v95
    // Predicated region
    $region26: #{tpu_custom_call.1} parent=1 // pred_check
      %p98 = pneg %p48
    $region27: #{tpu_custom_call.1} parent=1 // pred_check_branch
      %100 = sbr.rel (%p98) target = $region29
    $region28: #{tpu_custom_call.1} parent=1 // pred_region
      %v101 = vld [vmem:[#allocation2] sm:$0xff]
      %v102 = vld [vmem:[#allocation2 + $0x8] sm:$0xff]
      %v103 = vld [vmem:[%s2] sm:$0x1]
      %v105 = vperm.slane %v103, 0
      %v107 = vadd.f32 %v101, %v105
      %v108 = vadd.f32 %v102, %v105
      %v109 = vpack.c.bf16 %v107, %v107
      %v110 = vpack.c.bf16 %v108, %v108
      %vm111 = vcmask 257024
      %112 = vst.msk [vmem:[#allocation8] sm:$0xf] %vm111, %v109
      %113 = vst.msk [vmem:[#allocation8 + $0x4] sm:$0xf] %vm111, %v110
    $region29: #{tpu_custom_call.1} parent=1 // pred_fallthru
      _
    // Predicated region
    $region30: #{tpu_custom_call.1} parent=1 // pred_check
      _
    $region31: #{tpu_custom_call.1} parent=1 // pred_check_branch
      %115 = sbr.rel (0) target = $region33
    $region32: #{tpu_custom_call.1} parent=1 // pred_region
      %117 = vsyncadd [#allocation5], 0
      %s118 = sshll.u32 [#allocation8], 4
      %s119 = int_to_ptr.vmem [resolvable:$true] %s118
      %s120 = sshll.u32 %s3, 4
      %s121 = int_to_ptr.hbm [resolvable:$true] %s120
      %126 = dma.vmem_to_hbm [thread:$0]  %s119, 128, %s121, [#allocation5], 64, 64, 4
    $region33: #{tpu_custom_call.1} parent=1 // pred_fallthru
      _
    // Predicated region
    $region34: #{tpu_custom_call.1} parent=1 // pred_check
      _
    $region35: #{tpu_custom_call.1} parent=1 // pred_check_branch
      %128 = sbr.rel (0) target = $region37
    $region36: #{tpu_custom_call.1} parent=1 // pred_region
      %130 = dma.done [#allocation5], 128
    $region37: #{tpu_custom_call.1} parent=1 // pred_fallthru
      _
    %131 = vsyncpa [#allocation4], 1
    %132 = vsyncpa [#allocation7], 1
    %133 = vsyncpa [#allocation5], 1

</llo_original>
